<compile_context>
chip_gen: v6e
topology: v6e:2x2x1
jax: 0.10.0
libtpu: 0.0.40
codegen_flags: <defaults>
</compile_context>

<pallas_src>
import functools

import jax
import jax.numpy as jnp
from jax.experimental import pallas as pl
from jax.experimental.pallas import tpu as pltpu


# 48 MiB scoped VMEM: above v5e's 16 MiB default, below v7x's 64 MiB physical.
_VMEM_LIMIT_BYTES = 48 * 1024 * 1024
# Per-x-tile budgets. Pass 1 only tiles the input (outputs are tiny resident
# accumulators) -> 2 buffers ~= 16 MiB.  Pass 2 double-buffers in and out
# tiles -> 4 buffers ~= 16 MiB.  Both fit under the 48 MiB limit everywhere.
_POOL_TILE_BYTES = 8 * 1024 * 1024
_SCALE_TILE_BYTES = 4 * 1024 * 1024
# Fused single-pass path when the f32 (C, HW) slab is at most this big
# (in + out double buffers + f32 temporaries stay well under the VMEM limit).
_FUSED_MAX_SLAB_F32_BYTES = 6 * 1024 * 1024


def _choose_hw_tile(c, hw, itemsize, target_bytes):
    """Lane-dense (multiple of 128) HW tile fitting the per-tile byte budget."""
    max_lanes = max(128, (target_bytes // max(1, c * itemsize)) // 128 * 128)
    # Keep the tile within the 128-aligned extent of HW so that only the last
    # tile can be ragged (and never larger than the array when HW >= 128).
    hw_cap = max(128, (hw // 128) * 128)
    return min(max_lanes, hw_cap)


# --------------------------------------------------------------------------
# Fused single-pass kernel: whole (C, HW) slab resident per batch element.
# --------------------------------------------------------------------------
def _fused_kernel(x_ref, w1_ref, w2_ref, o_ref, *, hw):
    x32 = x_ref[...].astype(jnp.float32)                     # (1, C, HW)
    avg = jnp.sum(x32, axis=-1) * (1.0 / hw)                 # (1, C)
    mx = jnp.max(x32, axis=-1)                               # (1, C)

    w1 = w1_ref[...].astype(jnp.float32)                     # (Cr, C)
    w2 = w2_ref[...].astype(jnp.float32)                     # (C, Cr)

    def fc(v):  # (1, C) -> (1, C); tiny contraction kept on the VPU (not MXU)
        h = jnp.sum(v[:, None, :] * w1[None, :, :], axis=-1)          # (1, Cr)
        h = jnp.where(h >= 0, h, 0.2 * h)                              # LeakyReLU(0.2)
        return jnp.sum(h[:, None, :] * w2[None, :, :], axis=-1)       # (1, C)

    scale = jax.nn.sigmoid(fc(avg) + fc(mx))                 # (1, C)  f32
    scale = scale.astype(o_ref.dtype)[..., None]             # (1, C, 1)
    o_ref[...] = (x_ref[...] * scale).astype(o_ref.dtype)


# --------------------------------------------------------------------------
# Two-pass pipeline (large slabs): pass 1 = pooling reduction, pass 2 = scale.
# --------------------------------------------------------------------------
def _pool_kernel(x_ref, sum_ref, max_ref, *, hw, t_hw, masked):
    """Per-channel sum & max accumulated over lane-dense HW tiles."""
    t = pl.program_id(1)

    @pl.when(t == 0)
    def _():
        sum_ref[...] = jnp.zeros_like(sum_ref)
        max_ref[...] = jnp.full_like(max_ref, -jnp.inf)

    x = x_ref[...].astype(jnp.float32)                        # (1, C, T_HW)

    def _accumulate(x_sum, x_max):
        sum_ref[...] = sum_ref[...] + jnp.sum(x_sum, axis=-1, keepdims=True)
        max_ref[...] = jnp.maximum(max_ref[...],
                                   jnp.max(x_max, axis=-1, keepdims=True))

    if masked:
        last = pl.num_programs(1) - 1

        @pl.when(t != last)
        def _():
            _accumulate(x, x)            # full tiles: no iota/where cost

        @pl.when(t == last)
        def _():
            # Ragged last tile: OOB lanes hold unspecified data -> mask them
            # (0 for the sum, -inf for the max).
            lane = jax.lax.broadcasted_iota(jnp.int32, x.shape, dimension=2)
            valid = (t * t_hw + lane) < hw
            _accumulate(jnp.where(valid, x, 0.0), jnp.where(valid, x, -jnp.inf))
    else:
        _accumulate(x, x)


def _scale_kernel(x_ref, s_ref, o_ref):
    """y = per-channel scale * x on a lane-dense (C, T_HW) tile (input dtype)."""
    o_ref[...] = (x_ref[...] * s_ref[...]).astype(o_ref.dtype)


# --------------------------------------------------------------------------
# Wrapper
# --------------------------------------------------------------------------
def _channel_attention_impl(x, w1, w2, fused_max_bytes=_FUSED_MAX_SLAB_F32_BYTES):
    """x: (B, C, H, W); w1: (C//r, C); w2: (C, C//r). Returns (B, C, H, W)."""
    B, C, H, W = x.shape
    HW = H * W
    xf = x.reshape(B, C, HW)                                  # free view

    slab_f32_bytes = C * HW * 4
    if slab_f32_bytes <= fused_max_bytes:
        # ---- Fused single pass: read x once, write y once. ----
        y = pl.pallas_call(
            functools.partial(_fused_kernel, hw=HW),
            out_shape=jax.ShapeDtypeStruct((B, C, HW), x.dtype),
            grid_spec=pltpu.PrefetchScalarGridSpec(
                num_scalar_prefetch=0,
                grid=(B,),
                in_specs=[pl.BlockSpec((1, C, HW), lambda b: (b, 0, 0)),
                          pl.BlockSpec(w1.shape, lambda b: (0, 0)),
                          pl.BlockSpec(w2.shape, lambda b: (0, 0))],
                out_specs=pl.BlockSpec((1, C, HW), lambda b: (b, 0, 0)),
            ),
            compiler_params=pltpu.CompilerParams(
                dimension_semantics=("parallel",),
                vmem_limit_bytes=_VMEM_LIMIT_BYTES,
            ),
        )(xf, w1, w2)
        return y.reshape(B, C, H, W)

    itemsize = x.dtype.itemsize

    # ---- Pass 1: per-channel sum / max over lane-dense HW tiles. ----
    t1 = _choose_hw_tile(C, HW, itemsize, _POOL_TILE_BYTES)
    n1 = pl.cdiv(HW, t1)
    masked = (HW % t1) != 0
    sums, maxs = pl.pallas_call(
        functools.partial(_pool_kernel, hw=HW, t_hw=t1, masked=masked),
        out_shape=(jax.ShapeDtypeStruct((B, C, 1), jnp.float32),
                   jax.ShapeDtypeStruct((B, C, 1), jnp.float32)),
        grid_spec=pltpu.PrefetchScalarGridSpec(
            num_scalar_prefetch=0,
            grid=(B, n1),
            in_specs=[pl.BlockSpec((1, C, t1), lambda b, t: (b, 0, t))],
            out_specs=[pl.BlockSpec((1, C, 1), lambda b, t: (b, 0, 0)),
                       pl.BlockSpec((1, C, 1), lambda b, t: (b, 0, 0))],
        ),
        compiler_params=pltpu.CompilerParams(
            dimension_semantics=("parallel", "arbitrary"),
            vmem_limit_bytes=_VMEM_LIMIT_BYTES,
        ),
    )(xf)

    # ---- Tiny shared MLP on (B, C) in plain JAX (2-wide hidden: not MXU work). ----
    avg = sums[..., 0] * (1.0 / HW)                           # (B, C) f32
    mx = maxs[..., 0]                                         # (B, C) f32

    def fc(v):
        h = v @ w1.astype(jnp.float32).T                      # (B, Cr)
        h = jnp.where(h >= 0, h, 0.2 * h)                     # LeakyReLU(0.2)
        return h @ w2.astype(jnp.float32).T                   # (B, C)

    # Cast the scale to the input dtype so pass 2 multiplies natively.
    scale = jax.nn.sigmoid(fc(avg) + fc(mx)).astype(x.dtype)[..., None]   # (B, C, 1)

    # ---- Pass 2: y = scale * x on lane-dense tiles. No input/output aliasing
    # (aliasing a non-donated input forces a defensive copy).  Ragged last
    # blocks: OOB output lanes are simply not written back by Pallas. ----
    t2 = _choose_hw_tile(C, HW, itemsize, _SCALE_TILE_BYTES)
    n2 = pl.cdiv(HW, t2)
    y = pl.pallas_call(
        _scale_kernel,
        out_shape=jax.ShapeDtypeStruct((B, C, HW), x.dtype),
        grid_spec=pltpu.PrefetchScalarGridSpec(
            num_scalar_prefetch=0,
            grid=(B, n2),
            in_specs=[pl.BlockSpec((1, C, t2), lambda b, t: (b, 0, t)),
                      pl.BlockSpec((1, C, 1), lambda b, t: (b, 0, 0))],
            out_specs=pl.BlockSpec((1, C, t2), lambda b, t: (b, 0, t)),
        ),
        compiler_params=pltpu.CompilerParams(
            dimension_semantics=("parallel", "parallel"),
            vmem_limit_bytes=_VMEM_LIMIT_BYTES,
        ),
    )(xf, scale)
    return y.reshape(B, C, H, W)


channel_attention = jax.jit(_channel_attention_impl,
                            static_argnames=("fused_max_bytes",))


def channel_attention_reference(x, w1, w2):
    """Pure-JAX reference matching the PyTorch forward."""
    avg = jnp.mean(x, axis=(2, 3))             # (B, C)
    mx = jnp.max(x, axis=(2, 3))               # (B, C)

    def fc(v):
        h = v @ w1.T
        h = jnp.where(h >= 0, h, 0.2 * h)
        return h @ w2.T

    scale = jax.nn.sigmoid(fc(avg) + fc(mx))   # (B, C)
    return scale[:, :, None, None] * x


if __name__ == "__main__":
    # Module config: in_planes=32, reduction_ratio=16 -> hidden = 2.
    C = 32
    reduction_ratio = 16
    Cr = C // reduction_ratio

    key = jax.random.PRNGKey(0)
    kx, k1, k2, kx2 = jax.random.split(key, 4)

    # Deterministic synthetic weights: Conv2d(C, Cr, 1) -> (Cr, C); Conv2d(Cr, C, 1) -> (C, Cr).
    w1 = jax.random.normal(k1, (Cr, C), dtype=jnp.float32) * (1.0 / jnp.sqrt(C))
    w2 = jax.random.normal(k2, (C, Cr), dtype=jnp.float32) * (1.0 / jnp.sqrt(Cr))

    B, H, W = 2, 16, 16
    x = jax.random.normal(kx, (B, C, H, W), dtype=jnp.float32)
    H2, W2 = 12, 12
    x2 = jax.random.normal(kx2, (B, C, H2, W2), dtype=jnp.float32)

    # Case 1: fused single-pass path, HW a multiple of 128.
    y = jax.block_until_ready(channel_attention(x, w1, w2))
    y_ref = channel_attention_reference(x, w1, w2)
    assert y.shape == (B, C, H, W)
    assert jnp.allclose(y, y_ref, atol=1e-5, rtol=1e-5), "mismatch (fused, aligned)"

    # Case 2: fused single-pass path, ragged HW (block = full array dims).
    y2 = jax.block_until_ready(channel_attention(x2, w1, w2))
    y2_ref = channel_attention_reference(x2, w1, w2)
    assert y2.shape == (B, C, H2, W2)
    assert jnp.allclose(y2, y2_ref, atol=1e-5, rtol=1e-5), "mismatch (fused, ragged)"

    # Case 3: force the two-pass pipeline on the aligned shape (unmasked path).
    y3 = jax.block_until_ready(channel_attention(x, w1, w2, fused_max_bytes=0))
    assert jnp.allclose(y3, y_ref, atol=1e-5, rtol=1e-5), "mismatch (two-pass, aligned)"

    # Case 4: force the two-pass pipeline on the ragged shape (masked last tile
    # in pass 1; ragged output blocks in pass 2).
    y4 = jax.block_until_ready(channel_attention(x2, w1, w2, fused_max_bytes=0))
    assert jnp.allclose(y4, y2_ref, atol=1e-5, rtol=1e-5), "mismatch (two-pass, ragged)"

    print("KERNEL_OK")
</pallas_src>

<mosaic_0001>
module attributes {stable_mosaic.version = 11 : i64} {
  func.func @_fused_kernel(%arg0: i32, %arg1: memref<1x32x256xf32, #tpu.memory_space<vmem>>, %arg2: memref<2x32xf32, #tpu.memory_space<vmem>>, %arg3: memref<32x2xf32, #tpu.memory_space<vmem>>, %arg4: memref<1x32x256xf32, #tpu.memory_space<vmem>>) attributes {dimension_semantics = [#tpu.dimension_semantics<parallel>], iteration_bounds = array<i64: 2>, scalar_prefetch = 0 : i64, scratch_operands = 0 : i64, tpu.core_type = #tpu.core_type<tc>, window_params = [{transform_indices = @transform_0, window_bounds = array<i64: 1, 32, 256>}, {pipeline_mode = #tpu.pipeline_mode<synchronous>, transform_indices = @transform_1, window_bounds = array<i64: 2, 32>}, {pipeline_mode = #tpu.pipeline_mode<synchronous>, transform_indices = @transform_2, window_bounds = array<i64: 32, 2>}, {transform_indices = @transform_3, window_bounds = array<i64: 1, 32, 256>}]} {
    %c0 = arith.constant 0 : index
    %c0_0 = arith.constant 0 : index
    %c0_1 = arith.constant 0 : index
    %0 = vector.load %arg1[%c0, %c0_0, %c0_1] : memref<1x32x256xf32, #tpu.memory_space<vmem>>, vector<1x32x256xf32>
    %cst = arith.constant dense<0.000000e+00> : vector<1x32xf32>
    %1 = vector.multi_reduction <add>, %0, %cst [2] : vector<1x32x256xf32> to vector<1x32xf32>
    %cst_2 = arith.constant 3.906250e-03 : f32
    %2 = vector.broadcast %cst_2 : f32 to vector<1x32xf32>
    %3 = arith.mulf %1, %2 : vector<1x32xf32>
    %cst_3 = arith.constant dense<0xFF800000> : vector<1x32xf32>
    %4 = vector.multi_reduction <maximumf>, %0, %cst_3 [2] : vector<1x32x256xf32> to vector<1x32xf32>
    %c0_4 = arith.constant 0 : index
    %c0_5 = arith.constant 0 : index
    %5 = vector.load %arg2[%c0_4, %c0_5] : memref<2x32xf32, #tpu.memory_space<vmem>>, vector<2x32xf32>
    %c0_6 = arith.constant 0 : index
    %c0_7 = arith.constant 0 : index
    %6 = vector.load %arg3[%c0_6, %c0_7] : memref<32x2xf32, #tpu.memory_space<vmem>>, vector<32x2xf32>
    %7 = vector.shape_cast %3 : vector<1x32xf32> to vector<1x1x32xf32>
    %8 = vector.shape_cast %5 : vector<2x32xf32> to vector<1x2x32xf32>
    %9 = vector.broadcast %7 : vector<1x1x32xf32> to vector<1x2x32xf32>
    %10 = arith.mulf %9, %8 : vector<1x2x32xf32>
    %cst_8 = arith.constant dense<0.000000e+00> : vector<1x2xf32>
    %11 = vector.multi_reduction <add>, %10, %cst_8 [2] : vector<1x2x32xf32> to vector<1x2xf32>
    %cst_9 = arith.constant 0.000000e+00 : f32
    %12 = vector.broadcast %cst_9 : f32 to vector<1x2xf32>
    %13 = arith.cmpf oge, %11, %12 : vector<1x2xf32>
    %cst_10 = arith.constant 2.000000e-01 : f32
    %14 = vector.broadcast %cst_10 : f32 to vector<1x2xf32>
    %15 = arith.mulf %14, %11 : vector<1x2xf32>
    %16 = arith.select %13, %11, %15 : vector<1x2xi1>, vector<1x2xf32>
    %17 = vector.shape_cast %16 : vector<1x2xf32> to vector<1x1x2xf32>
    %18 = vector.shape_cast %6 : vector<32x2xf32> to vector<1x32x2xf32>
    %19 = vector.broadcast %17 : vector<1x1x2xf32> to vector<1x32x2xf32>
    %20 = arith.mulf %19, %18 : vector<1x32x2xf32>
    %cst_11 = arith.constant dense<0.000000e+00> : vector<1x32xf32>
    %21 = vector.multi_reduction <add>, %20, %cst_11 [2] : vector<1x32x2xf32> to vector<1x32xf32>
    %22 = vector.shape_cast %4 : vector<1x32xf32> to vector<1x1x32xf32>
    %23 = vector.shape_cast %5 : vector<2x32xf32> to vector<1x2x32xf32>
    %24 = vector.broadcast %22 : vector<1x1x32xf32> to vector<1x2x32xf32>
    %25 = arith.mulf %24, %23 : vector<1x2x32xf32>
    %cst_12 = arith.constant dense<0.000000e+00> : vector<1x2xf32>
    %26 = vector.multi_reduction <add>, %25, %cst_12 [2] : vector<1x2x32xf32> to vector<1x2xf32>
    %cst_13 = arith.constant 0.000000e+00 : f32
    %27 = vector.broadcast %cst_13 : f32 to vector<1x2xf32>
    %28 = arith.cmpf oge, %26, %27 : vector<1x2xf32>
    %cst_14 = arith.constant 2.000000e-01 : f32
    %29 = vector.broadcast %cst_14 : f32 to vector<1x2xf32>
    %30 = arith.mulf %29, %26 : vector<1x2xf32>
    %31 = arith.select %28, %26, %30 : vector<1x2xi1>, vector<1x2xf32>
    %32 = vector.shape_cast %31 : vector<1x2xf32> to vector<1x1x2xf32>
    %33 = vector.shape_cast %6 : vector<32x2xf32> to vector<1x32x2xf32>
    %34 = vector.broadcast %32 : vector<1x1x2xf32> to vector<1x32x2xf32>
    %35 = arith.mulf %34, %33 : vector<1x32x2xf32>
    %cst_15 = arith.constant dense<0.000000e+00> : vector<1x32xf32>
    %36 = vector.multi_reduction <add>, %35, %cst_15 [2] : vector<1x32x2xf32> to vector<1x32xf32>
    %37 = arith.addf %21, %36 : vector<1x32xf32>
    %38 = arith.negf %37 : vector<1x32xf32>
    %39 = math.exp %38 : vector<1x32xf32>
    %cst_16 = arith.constant 1.000000e+00 : f32
    %40 = vector.broadcast %cst_16 : f32 to vector<1x32xf32>
    %41 = arith.addf %40, %39 : vector<1x32xf32>
    %42 = arith.divf %40, %41 : vector<1x32xf32>
    %43 = vector.shape_cast %42 : vector<1x32xf32> to vector<1x32x1xf32>
    %c0_17 = arith.constant 0 : index
    %c0_18 = arith.constant 0 : index
    %c0_19 = arith.constant 0 : index
    %44 = vector.load %arg1[%c0_17, %c0_18, %c0_19] : memref<1x32x256xf32, #tpu.memory_space<vmem>>, vector<1x32x256xf32>
    %45 = vector.broadcast %43 : vector<1x32x1xf32> to vector<1x32x256xf32>
    %46 = arith.mulf %44, %45 : vector<1x32x256xf32>
    %c0_20 = arith.constant 0 : index
    %c0_21 = arith.constant 0 : index
    %c0_22 = arith.constant 0 : index
    %47 = vector.load %arg4[%c0_20, %c0_21, %c0_22] : memref<1x32x256xf32, #tpu.memory_space<vmem>>, vector<1x32x256xf32>
    tpu.vector_store %arg4[%c0_20, %c0_21, %c0_22], %46 {strides = array<i32>} : memref<1x32x256xf32, #tpu.memory_space<vmem>>, vector<1x32x256xf32>,
    return
  }
  func.func @transform_0(%arg0: i32) -> (i32, i32, i32) {
    %c0_i32 = arith.constant 0 : i32
    %c0_i32_0 = arith.constant 0 : i32
    %c0_i32_1 = arith.constant 0 : i32
    return %arg0, %c0_i32, %c0_i32_0 : i32, i32, i32
  }
  func.func @transform_1(%arg0: i32) -> (i32, i32) {
    %c0_i32 = arith.constant 0 : i32
    %c0_i32_0 = arith.constant 0 : i32
    %c0_i32_1 = arith.constant 0 : i32
    return %c0_i32, %c0_i32_0 : i32, i32
  }
  func.func @transform_2(%arg0: i32) -> (i32, i32) {
    %c0_i32 = arith.constant 0 : i32
    %c0_i32_0 = arith.constant 0 : i32
    %c0_i32_1 = arith.constant 0 : i32
    return %c0_i32, %c0_i32_0 : i32, i32
  }
  func.func @transform_3(%arg0: i32) -> (i32, i32, i32) {
    %c0_i32 = arith.constant 0 : i32
    %c0_i32_0 = arith.constant 0 : i32
    %c0_i32_1 = arith.constant 0 : i32
    return %arg0, %c0_i32, %c0_i32_0 : i32, i32, i32
  }
}

</mosaic_0001>

<llo_original>
// kernel: _channel_attention_impl.1
$region0: #{_channel_attention_impl.1}
  #allocation0 [shape = 'u32[]', space=smem, size = 0x4, offset = 0x4, fixed_abs, tag = 'smem constant byte address 0x4 - core index']
  #allocation1 [shape = 'u32[144,128]{1,0:T(1,128)}', space=vmem, size = 0x12000, scoped, tag = 'internal scratch']
  %s0 = inlined_call_operand.vmem [shape: f32[2,32,256], index: 0, kind: input, shape index: {}]
  %s1 = inlined_call_operand.vmem [shape: f32[2,32], index: 1, kind: input, shape index: {}]
  %s2 = inlined_call_operand.vmem [shape: f32[32,2], index: 2, kind: input, shape index: {}]
  %s3 = inlined_call_operand.vmem [shape: f32[2,32,256], index: 3, kind: output, shape index: {}]
  %s4 = sld [smem:[#allocation0]]
  $region45: #{_channel_attention_impl.1} parent=0
    _
  %s6 = ssub.s32 1, %s4
  %s7 = scalar_select 0, %s6, %s4
  loop: start=0, step=1, limit=4
  $region2: #{_channel_attention_impl.1} parent=0 // loop_pre_header
    _
  $region3: #{_channel_attention_impl.1} parent=0 // loop_header
    %s9 = sphi 0, %s13
    %p10 = scmp.ge.s32.totalorder %s9, 4
    %s19 = sphi 0, %s21
    %s22 = sphi 0, %s19
    %s23 = sphi 0, %s22
    %s39 = sphi 0, %s23
    %s43 = sphi 0, %s43
    %s45 = sphi 0, %s43
    %s46 = sphi 0, %s45
    %s60 = sphi 0, %s46
    %s64 = sphi 0, %s64
    %s66 = sphi 0, %s64
    %s67 = sphi 0, %s66
    %s81 = sphi 0, %s67
    %s87 = sphi 0, %s89
    %s90 = sphi 0, %s87
    %s91 = sphi 0, %s90
    %s107 = sphi 0, %s91
  $region4: #{_channel_attention_impl.1} parent=0 // loop_header_branch
    %12 = sbr.rel (%p10) target = $region8
  $region5: #{_channel_attention_impl.1} parent=0 // loop_body
    %s14 = ssub.s32 %s9, 1
    %s15 = ssub.s32 %s9, 2
    %s16 = sadd.s32 %s9, 1
    %s17 = ssub.s32 %s9, %s16
    %p18 = scmp.eq.s32.totalorder %s17, 0
    %s20 = sadd.s32 %s19, 1
    %s21 = scalar_select %p18, %s19, %s20
    %p24 = pneg %p18
    %p25 = scmp.eq.s32.totalorder %s9, 1
    %p26 = por %p24, %p25
    %p27 = scmp.ne.s32.totalorder %s19, %s22
    %p28 = scmp.eq.s32.totalorder %s9, 0
    %p29 = por %p27, %p28
    %p30 = scmp.ne.s32.totalorder %s19, %s22
    %p31 = scmp.eq.s32.totalorder %s14, 1
    %p32 = por %p30, %p31
    %p33 = scmp.ne.s32.totalorder %s22, %s23
    %p34 = scmp.eq.s32.totalorder %s14, 0
    %p35 = por %p33, %p34
    %p36 = scmp.ne.s32.totalorder %s22, %s23
    %p37 = scmp.eq.s32.totalorder %s15, 1
    %p38 = por %p36, %p37
    %p40 = scmp.ne.s32.totalorder %s23, %s39
    %p41 = scmp.eq.s32.totalorder %s15, 0
    %p42 = por %p40, %p41
    %s44 = sadd.s32 %s43, 1
    %p47 = scmp.eq.s32.totalorder %s9, 1
    %p48 = scmp.ne.s32.totalorder %s43, %s45
    %p49 = scmp.eq.s32.totalorder %s9, 0
    %p50 = por %p48, %p49
    %p51 = scmp.ne.s32.totalorder %s43, %s45
    %p52 = scmp.eq.s32.totalorder %s14, 1
    %p53 = por %p51, %p52
    %p54 = scmp.ne.s32.totalorder %s45, %s46
    %p55 = scmp.eq.s32.totalorder %s14, 0
    %p56 = por %p54, %p55
    %p57 = scmp.ne.s32.totalorder %s45, %s46
    %p58 = scmp.eq.s32.totalorder %s15, 1
    %p59 = por %p57, %p58
    %p61 = scmp.ne.s32.totalorder %s46, %s60
    %p62 = scmp.eq.s32.totalorder %s15, 0
    %p63 = por %p61, %p62
    %s65 = sadd.s32 %s64, 1
    %p68 = scmp.eq.s32.totalorder %s9, 1
    %p69 = scmp.ne.s32.totalorder %s64, %s66
    %p70 = scmp.eq.s32.totalorder %s9, 0
    %p71 = por %p69, %p70
    %p72 = scmp.ne.s32.totalorder %s64, %s66
    %p73 = scmp.eq.s32.totalorder %s14, 1
    %p74 = por %p72, %p73
    %p75 = scmp.ne.s32.totalorder %s66, %s67
    %p76 = scmp.eq.s32.totalorder %s14, 0
    %p77 = por %p75, %p76
    %p78 = scmp.ne.s32.totalorder %s66, %s67
    %p79 = scmp.eq.s32.totalorder %s15, 1
    %p80 = por %p78, %p79
    %p82 = scmp.ne.s32.totalorder %s67, %s81
    %p83 = scmp.eq.s32.totalorder %s15, 0
    %p84 = por %p82, %p83
    %s85 = ssub.s32 %s9, %s16
    %p86 = scmp.eq.s32.totalorder %s85, 0
    %s88 = sadd.s32 %s87, 1
    %s89 = scalar_select %p86, %s87, %s88
    %p92 = pneg %p86
    %p93 = scmp.eq.s32.totalorder %s9, 1
    %p94 = por %p92, %p93
    %p95 = scmp.ne.s32.totalorder %s87, %s90
    %p96 = scmp.eq.s32.totalorder %s9, 0
    %p97 = por %p95, %p96
    %p98 = scmp.ne.s32.totalorder %s87, %s90
    %p99 = scmp.eq.s32.totalorder %s14, 1
    %p100 = por %p98, %p99
    %p101 = scmp.ne.s32.totalorder %s90, %s91
    %p102 = scmp.eq.s32.totalorder %s14, 0
    %p103 = por %p101, %p102
    %p104 = scmp.ne.s32.totalorder %s90, %s91
    %p105 = scmp.eq.s32.totalorder %s15, 1
    %p106 = por %p104, %p105
    %p108 = scmp.ne.s32.totalorder %s91, %s107
    %p109 = scmp.eq.s32.totalorder %s15, 0
    %p110 = por %p108, %p109
    %p111 = scmp.le.s32.totalorder 1, %s9
    %p112 = scmp.lt.s32.totalorder %s9, 3
    %p113 = pnand %p111, %p112
    %p114 = pneg %p113
    // Predicated region
    $region9: #{_channel_attention_impl.1} parent=5 // pred_check
      _
    $region10: #{_channel_attention_impl.1} parent=5 // pred_check_branch
      %116 = sbr.rel (%p113) target = $region12
    $region11: #{_channel_attention_impl.1} parent=5 // pred_region
      %s117 = ssub.s32 %s9, 1
      // Predicated region
      $region13: #{_channel_attention_impl.1} parent=11 // pred_check
        %p118 = pneg %p56
      $region14: #{_channel_attention_impl.1} parent=11 // pred_check_branch
        %120 = sbr.rel (%p118) target = $region16
      $region15: #{_channel_attention_impl.1} parent=11 // pred_region
        _
      $region16: #{_channel_attention_impl.1} parent=11 // pred_fallthru
        _
      // Predicated region
      $region17: #{_channel_attention_impl.1} parent=11 // pred_check
        %p121 = pneg %p77
      $region18: #{_channel_attention_impl.1} parent=11 // pred_check_branch
        %123 = sbr.rel (%p121) target = $region20
      $region19: #{_channel_attention_impl.1} parent=11 // pred_region
        _
      $region20: #{_channel_attention_impl.1} parent=11 // pred_fallthru
        _
    $region12: #{_channel_attention_impl.1} parent=5 // pred_fallthru
      _
    %p124 = scmp.lt.s32.totalorder %s9, 2
    // Predicated region
    $region21: #{_channel_attention_impl.1} parent=5 // pred_check
      %p125 = pneg %p124
    $region22: #{_channel_attention_impl.1} parent=5 // pred_check_branch
      %127 = sbr.rel (%p125) target = $region24
    $region23: #{_channel_attention_impl.1} parent=5 // pred_region
      // Predicated region
      $region25: #{_channel_attention_impl.1} parent=23 // pred_check
        %p128 = pneg %p29
      $region26: #{_channel_attention_impl.1} parent=23 // pred_check_branch
        %130 = sbr.rel (%p128) target = $region28
      $region27: #{_channel_attention_impl.1} parent=23 // pred_region
        %p131 = scmp.lt.s32.totalorder %s9, 1
        %s132 = scalar_select %p131, %s9, 1
        %s133 = smul.addr %s132, 8
        %s134 = smul.addr %s133, 8
        %s135 = scalar_lea.vmem %s0, %s134
      $region28: #{_channel_attention_impl.1} parent=23 // pred_fallthru
        _
    $region24: #{_channel_attention_impl.1} parent=5 // pred_fallthru
      _
    %p136 = scmp.le.s32.totalorder 1, %s9
    %p137 = scmp.lt.s32.totalorder %s9, 3
    %p138 = pnand %p136, %p137
    %p139 = pneg %p138
    // Predicated region
    $region29: #{_channel_attention_impl.1} parent=5 // pred_check
      _
    $region30: #{_channel_attention_impl.1} parent=5 // pred_check_branch
      %141 = sbr.rel (%p138) target = $region32
    $region31: #{_channel_attention_impl.1} parent=5 // pred_region
      %s142 = ssub.s32 %s9, 1
      %p143 = scmp.lt.s32.totalorder %s14, 1
      %s144 = scalar_select %p143, %s14, 1
      %s145 = smul.addr %s144, 8
      %s146 = smul.addr %s145, 8
      %s147 = scalar_lea.vmem %s0, %s146
      %p148 = pneg %p35
      %p149 = pneg %p32
      %p150 = pneg %p56
      %p151 = pneg %p53
      %p152 = pneg %p77
      %p153 = pneg %p74
      %p154 = pneg %p103
      %p155 = pneg %p100
      %p156 = scmp.lt.s32.totalorder %s14, 1
      %s157 = scalar_select %p156, %s14, 1
      %s158 = smul.addr %s157, 8
      %s159 = smul.addr %s158, 8
      %s160 = scalar_lea.vmem %s3, %s159
      %p161 = scmp.lt.s32.totalorder %s14, 1
      %s162 = scalar_select %p161, %s14, 1
      %s163 = smul.addr %s162, 8
      %s164 = smul.addr %s163, 8
      %s165 = scalar_lea.vmem %s0, %s164
      %p166 = scmp.lt.s32.totalorder %s14, 1
      %s167 = scalar_select %p166, %s14, 1
      %s168 = smul.addr %s167, 8
      %s169 = smul.addr %s168, 8
      %s170 = scalar_lea.vmem %s3, %s169
      %v171 = vld [vmem:[%s165] sm:$0xff]
      %v172 = vld [vmem:[%s165 + $0x8] sm:$0xff]
      %v173 = vld [vmem:[%s165 + $0x10] sm:$0xff]
      %v174 = vld [vmem:[%s165 + $0x18] sm:$0xff]
      %v175 = vld [vmem:[%s165 + $0x20] sm:$0xff]
      %v176 = vld [vmem:[%s165 + $0x28] sm:$0xff]
      %v177 = vld [vmem:[%s165 + $0x30] sm:$0xff]
      %v178 = vld [vmem:[%s165 + $0x38] sm:$0xff]
      %v179 = vadd.f32 %v171, %v172
      %180 = vadd.xlane.f32.xlu0 %v179
      %v181 = vpop.xlane.xlu0 %180
      %v182 = vadd.f32 %v173, %v174
      %183 = vadd.xlane.f32.xlu0 %v182
      %v184 = vpop.xlane.xlu0 %183
      %v185 = vadd.f32 %v175, %v176
      %186 = vadd.xlane.f32.xlu0 %v185
      %v187 = vpop.xlane.xlu0 %186
      %v188 = vadd.f32 %v177, %v178
      %189 = vadd.xlane.f32.xlu0 %v188
      %v190 = vpop.xlane.xlu0 %189
      %v191 = vmul.f32 %v181, 0.00390625
      %v192 = vmul.f32 %v184, 0.00390625
      %v193 = vmul.f32 %v187, 0.00390625
      %v194 = vmul.f32 %v190, 0.00390625
      %v195 = vmax.f32 %v171, %v172
      %196 = vmax.xlane.f32.xlu0 %v195
      %v197 = vpop.xlane.xlu0 %196
      %v198 = vmax.f32 %v173, %v174
      %199 = vmax.xlane.f32.xlu0 %v198
      %v200 = vpop.xlane.xlu0 %199
      %v201 = vmax.f32 %v175, %v176
      %202 = vmax.xlane.f32.xlu0 %v201
      %v203 = vpop.xlane.xlu0 %202
      %v204 = vmax.f32 %v177, %v178
      %205 = vmax.xlane.f32.xlu0 %v204
      %v206 = vpop.xlane.xlu0 %205
      %v207 = vld [vmem:[%s1] sm:$0x3]
      %v208 = vld [vmem:[%s2] sm:$0xff]
      %v209 = vld [vmem:[%s2 + $0x8] sm:$0xff]
      %v210 = vld [vmem:[%s2 + $0x10] sm:$0xff]
      %v211 = vld [vmem:[%s2 + $0x18] sm:$0xff]
      %v213 = vlaneseq
      %v214 = vshrl.u32 %v213, 7
      %v215 = vsub.s32 0, %v214
      %v216 = vrot.slane %v207, %v215
      %218 = vbcast.lane.b32.xlu0 %v216, 256
      %v219 = vpop.permute.xlu0 %218
      %s221 = sor.u32 256, 8
      %222 = vbcast.lane.b32.xlu0 %v216, %s221
      %v223 = vpop.permute.xlu0 %222
      %s225 = sor.u32 256, 16
      %226 = vbcast.lane.b32.xlu0 %v216, %s225
      %v227 = vpop.permute.xlu0 %226
      %s229 = sor.u32 256, 24
      %230 = vbcast.lane.b32.xlu0 %v216, %s229
      %v231 = vpop.permute.xlu0 %230
      %v232 = vlaneseq
      %v233 = vshrl.u32 %v232, 7
      %v234 = vsub.s32 1, %v233
      %v235 = vrot.slane %v207, %v234
      %237 = vbcast.lane.b32.xlu0 %v235, 256
      %v238 = vpop.permute.xlu0 %237
      %s240 = sor.u32 256, 8
      %241 = vbcast.lane.b32.xlu0 %v235, %s240
      %v242 = vpop.permute.xlu0 %241
      %s244 = sor.u32 256, 16
      %245 = vbcast.lane.b32.xlu0 %v235, %s244
      %v246 = vpop.permute.xlu0 %245
      %s248 = sor.u32 256, 24
      %249 = vbcast.lane.b32.xlu0 %v235, %s248
      %v250 = vpop.permute.xlu0 %249
      %v259 = vmul.f32 %v191, %v219
      %v260 = vmul.f32 %v192, %v223
      %v261 = vmul.f32 %v193, %v227
      %v262 = vmul.f32 %v194, %v231
      %v263 = vmul.f32 %v191, %v238
      %v264 = vmul.f32 %v192, %v242
      %v265 = vmul.f32 %v193, %v246
      %v266 = vmul.f32 %v194, %v250
      %275 = vset.pattern.permute.xlu0 0
      %276 = vperm.xlu0 %275, %v259
      %v277 = vpop.permute.xlu0 %276
      %278 = vset.pattern.permute.xlu0 0
      %279 = vperm.xlu0 %278, %v260
      %v280 = vpop.permute.xlu0 %279
      %281 = vset.pattern.permute.xlu0 0
      %282 = vperm.xlu0 %281, %v261
      %v283 = vpop.permute.xlu0 %282
      %284 = vset.pattern.permute.xlu0 0
      %285 = vperm.xlu0 %284, %v262
      %v286 = vpop.permute.xlu0 %285
      %287 = vset.pattern.permute.xlu0 0
      %288 = vperm.xlu0 %287, %v263
      %v289 = vpop.permute.xlu0 %288
      %290 = vset.pattern.permute.xlu0 0
      %291 = vperm.xlu0 %290, %v264
      %v292 = vpop.permute.xlu0 %291
      %293 = vset.pattern.permute.xlu0 0
      %294 = vperm.xlu0 %293, %v265
      %v295 = vpop.permute.xlu0 %294
      %296 = vset.pattern.permute.xlu0 0
      %297 = vperm.xlu0 %296, %v266
      %v298 = vpop.permute.xlu0 %297
      %v299 = vlaneseq
      %v300 = vand.u32 %v299, 127
      %v301 = vlaneseq
      %v302 = vshrl.u32 %v301, 7
      %v303 = vsub.s32 %v300, %v302
      %v304 = vrot.slane %v277, %v303
      %v305 = vadd.s32 %v300, 4294967288
      %v306 = vlaneseq
      %v307 = vshrl.u32 %v306, 7
      %v308 = vsub.s32 %v305, %v307
      %v309 = vrot.slane %v280, %v308
      %vm310 = vcmask 130112
      %v311 = vsel %vm310, %v309, %v304
      %v312 = vadd.s32 %v300, 4294967280
      %v313 = vlaneseq
      %v314 = vshrl.u32 %v313, 7
      %v315 = vsub.s32 %v312, %v314
      %v316 = vrot.slane %v283, %v315
      %vm317 = vcmask 195712
      %v318 = vsel %vm317, %v316, %v311
      %v319 = vadd.s32 %v300, 4294967272
      %v320 = vlaneseq
      %v321 = vshrl.u32 %v320, 7
      %v322 = vsub.s32 %v319, %v321
      %v323 = vrot.slane %v286, %v322
      %vm324 = vcmask 261312
      %v325 = vsel %vm324, %v323, %v318
      %v326 = vlaneseq
      %v327 = vshrl.u32 %v326, 7
      %v328 = vsub.s32 %v300, %v327
      %v329 = vrot.slane %v289, %v328
      %v330 = vlaneseq
      %v331 = vshrl.u32 %v330, 7
      %v332 = vsub.s32 %v305, %v331
      %v333 = vrot.slane %v292, %v332
      %v334 = vsel %vm310, %v333, %v329
      %v335 = vlaneseq
      %v336 = vshrl.u32 %v335, 7
      %v337 = vsub.s32 %v312, %v336
      %v338 = vrot.slane %v295, %v337
      %v339 = vsel %vm317, %v338, %v334
      %v340 = vlaneseq
      %v341 = vshrl.u32 %v340, 7
      %v342 = vsub.s32 %v319, %v341
      %v343 = vrot.slane %v298, %v342
      %v344 = vsel %vm324, %v343, %v339
      %vm345 = vcmask 1041409
      %v346 = vsel %vm345, %v344, %v325
      %vm348 = vcmask 254976
      %v349 = vsel %vm348, %v346, 0.0
      %350 = vadd.xlane.f32.xlu0 %v349
      %v351 = vpop.xlane.xlu0 %350
      %vm352 = vcmp.ge.f32.partialorder %v351, 0.0
      %v353 = vmul.f32 %v351, 0.2
      %v354 = vsel %vm352, %v351, %v353
      %v359 = vlaneseq
      %v360 = vshrl.u32 %v359, 7
      %v361 = vsub.s32 0, %v360
      %v362 = vrot.slane %v208, %v361
      %364 = vbcast.lane.b32.xlu0 %v362, 256
      %v365 = vpop.permute.xlu0 %364
      %v366 = vlaneseq
      %v367 = vshrl.u32 %v366, 7
      %v368 = vsub.s32 1, %v367
      %v369 = vrot.slane %v208, %v368
      %371 = vbcast.lane.b32.xlu0 %v369, 256
      %v372 = vpop.permute.xlu0 %371
      %v373 = vlaneseq
      %v374 = vshrl.u32 %v373, 7
      %v375 = vsub.s32 2, %v374
      %v376 = vrot.slane %v208, %v375
      %378 = vbcast.lane.b32.xlu0 %v376, 256
      %v379 = vpop.permute.xlu0 %378
      %v380 = vlaneseq
      %v381 = vshrl.u32 %v380, 7
      %v382 = vsub.s32 3, %v381
      %v383 = vrot.slane %v208, %v382
      %385 = vbcast.lane.b32.xlu0 %v383, 256
      %v386 = vpop.permute.xlu0 %385
      %v387 = vlaneseq
      %v388 = vshrl.u32 %v387, 7
      %v389 = vsub.s32 4, %v388
      %v390 = vrot.slane %v208, %v389
      %392 = vbcast.lane.b32.xlu0 %v390, 256
      %v393 = vpop.permute.xlu0 %392
      %v394 = vlaneseq
      %v395 = vshrl.u32 %v394, 7
      %v396 = vsub.s32 5, %v395
      %v397 = vrot.slane %v208, %v396
      %399 = vbcast.lane.b32.xlu0 %v397, 256
      %v400 = vpop.permute.xlu0 %399
      %v401 = vlaneseq
      %v402 = vshrl.u32 %v401, 7
      %v403 = vsub.s32 6, %v402
      %v404 = vrot.slane %v208, %v403
      %406 = vbcast.lane.b32.xlu0 %v404, 256
      %v407 = vpop.permute.xlu0 %406
      %v408 = vlaneseq
      %v409 = vshrl.u32 %v408, 7
      %v410 = vsub.s32 7, %v409
      %v411 = vrot.slane %v208, %v410
      %413 = vbcast.lane.b32.xlu0 %v411, 256
      %v414 = vpop.permute.xlu0 %413
      %v415 = vlaneseq
      %v416 = vshrl.u32 %v415, 7
      %v417 = vsub.s32 0, %v416
      %v418 = vrot.slane %v209, %v417
      %420 = vbcast.lane.b32.xlu0 %v418, 256
      %v421 = vpop.permute.xlu0 %420
      %v422 = vlaneseq
      %v423 = vshrl.u32 %v422, 7
      %v424 = vsub.s32 1, %v423
      %v425 = vrot.slane %v209, %v424
      %427 = vbcast.lane.b32.xlu0 %v425, 256
      %v428 = vpop.permute.xlu0 %427
      %v429 = vlaneseq
      %v430 = vshrl.u32 %v429, 7
      %v431 = vsub.s32 2, %v430
      %v432 = vrot.slane %v209, %v431
      %434 = vbcast.lane.b32.xlu0 %v432, 256
      %v435 = vpop.permute.xlu0 %434
      %v436 = vlaneseq
      %v437 = vshrl.u32 %v436, 7
      %v438 = vsub.s32 3, %v437
      %v439 = vrot.slane %v209, %v438
      %441 = vbcast.lane.b32.xlu0 %v439, 256
      %v442 = vpop.permute.xlu0 %441
      %v443 = vlaneseq
      %v444 = vshrl.u32 %v443, 7
      %v445 = vsub.s32 4, %v444
      %v446 = vrot.slane %v209, %v445
      %448 = vbcast.lane.b32.xlu0 %v446, 256
      %v449 = vpop.permute.xlu0 %448
      %v450 = vlaneseq
      %v451 = vshrl.u32 %v450, 7
      %v452 = vsub.s32 5, %v451
      %v453 = vrot.slane %v209, %v452
      %455 = vbcast.lane.b32.xlu0 %v453, 256
      %v456 = vpop.permute.xlu0 %455
      %v457 = vlaneseq
      %v458 = vshrl.u32 %v457, 7
      %v459 = vsub.s32 6, %v458
      %v460 = vrot.slane %v209, %v459
      %462 = vbcast.lane.b32.xlu0 %v460, 256
      %v463 = vpop.permute.xlu0 %462
      %v464 = vlaneseq
      %v465 = vshrl.u32 %v464, 7
      %v466 = vsub.s32 7, %v465
      %v467 = vrot.slane %v209, %v466
      %469 = vbcast.lane.b32.xlu0 %v467, 256
      %v470 = vpop.permute.xlu0 %469
      %v471 = vlaneseq
      %v472 = vshrl.u32 %v471, 7
      %v473 = vsub.s32 0, %v472
      %v474 = vrot.slane %v210, %v473
      %476 = vbcast.lane.b32.xlu0 %v474, 256
      %v477 = vpop.permute.xlu0 %476
      %v478 = vlaneseq
      %v479 = vshrl.u32 %v478, 7
      %v480 = vsub.s32 1, %v479
      %v481 = vrot.slane %v210, %v480
      %483 = vbcast.lane.b32.xlu0 %v481, 256
      %v484 = vpop.permute.xlu0 %483
      %v485 = vlaneseq
      %v486 = vshrl.u32 %v485, 7
      %v487 = vsub.s32 2, %v486
      %v488 = vrot.slane %v210, %v487
      %490 = vbcast.lane.b32.xlu0 %v488, 256
      %v491 = vpop.permute.xlu0 %490
      %v492 = vlaneseq
      %v493 = vshrl.u32 %v492, 7
      %v494 = vsub.s32 3, %v493
      %v495 = vrot.slane %v210, %v494
      %497 = vbcast.lane.b32.xlu0 %v495, 256
      %v498 = vpop.permute.xlu0 %497
      %v499 = vlaneseq
      %v500 = vshrl.u32 %v499, 7
      %v501 = vsub.s32 4, %v500
      %v502 = vrot.slane %v210, %v501
      %504 = vbcast.lane.b32.xlu0 %v502, 256
      %v505 = vpop.permute.xlu0 %504
      %v506 = vlaneseq
      %v507 = vshrl.u32 %v506, 7
      %v508 = vsub.s32 5, %v507
      %v509 = vrot.slane %v210, %v508
      %511 = vbcast.lane.b32.xlu0 %v509, 256
      %v512 = vpop.permute.xlu0 %511
      %v513 = vlaneseq
      %v514 = vshrl.u32 %v513, 7
      %v515 = vsub.s32 6, %v514
      %v516 = vrot.slane %v210, %v515
      %518 = vbcast.lane.b32.xlu0 %v516, 256
      %v519 = vpop.permute.xlu0 %518
      %v520 = vlaneseq
      %v521 = vshrl.u32 %v520, 7
      %v522 = vsub.s32 7, %v521
      %v523 = vrot.slane %v210, %v522
      %525 = vbcast.lane.b32.xlu0 %v523, 256
      %v526 = vpop.permute.xlu0 %525
      %v527 = vlaneseq
      %v528 = vshrl.u32 %v527, 7
      %v529 = vsub.s32 0, %v528
      %v530 = vrot.slane %v211, %v529
      %532 = vbcast.lane.b32.xlu0 %v530, 256
      %v533 = vpop.permute.xlu0 %532
      %v534 = vlaneseq
      %v535 = vshrl.u32 %v534, 7
      %v536 = vsub.s32 1, %v535
      %v537 = vrot.slane %v211, %v536
      %539 = vbcast.lane.b32.xlu0 %v537, 256
      %v540 = vpop.permute.xlu0 %539
      %v541 = vlaneseq
      %v542 = vshrl.u32 %v541, 7
      %v543 = vsub.s32 2, %v542
      %v544 = vrot.slane %v211, %v543
      %546 = vbcast.lane.b32.xlu0 %v544, 256
      %v547 = vpop.permute.xlu0 %546
      %v548 = vlaneseq
      %v549 = vshrl.u32 %v548, 7
      %v550 = vsub.s32 3, %v549
      %v551 = vrot.slane %v211, %v550
      %553 = vbcast.lane.b32.xlu0 %v551, 256
      %v554 = vpop.permute.xlu0 %553
      %v555 = vlaneseq
      %v556 = vshrl.u32 %v555, 7
      %v557 = vsub.s32 4, %v556
      %v558 = vrot.slane %v211, %v557
      %560 = vbcast.lane.b32.xlu0 %v558, 256
      %v561 = vpop.permute.xlu0 %560
      %v562 = vlaneseq
      %v563 = vshrl.u32 %v562, 7
      %v564 = vsub.s32 5, %v563
      %v565 = vrot.slane %v211, %v564
      %567 = vbcast.lane.b32.xlu0 %v565, 256
      %v568 = vpop.permute.xlu0 %567
      %v569 = vlaneseq
      %v570 = vshrl.u32 %v569, 7
      %v571 = vsub.s32 6, %v570
      %v572 = vrot.slane %v211, %v571
      %574 = vbcast.lane.b32.xlu0 %v572, 256
      %v575 = vpop.permute.xlu0 %574
      %v576 = vlaneseq
      %v577 = vshrl.u32 %v576, 7
      %v578 = vsub.s32 7, %v577
      %v579 = vrot.slane %v211, %v578
      %581 = vbcast.lane.b32.xlu0 %v579, 256
      %v582 = vpop.permute.xlu0 %581
      %v615 = vmul.f32 %v354, %v365
      %v616 = vmul.f32 %v354, %v372
      %v617 = vmul.f32 %v354, %v379
      %v618 = vmul.f32 %v354, %v386
      %v619 = vmul.f32 %v354, %v393
      %v620 = vmul.f32 %v354, %v400
      %v621 = vmul.f32 %v354, %v407
      %v622 = vmul.f32 %v354, %v414
      %v623 = vmul.f32 %v354, %v421
      %v624 = vmul.f32 %v354, %v428
      %v625 = vmul.f32 %v354, %v435
      %v626 = vmul.f32 %v354, %v442
      %v627 = vmul.f32 %v354, %v449
      %v628 = vmul.f32 %v354, %v456
      %v629 = vmul.f32 %v354, %v463
      %v630 = vmul.f32 %v354, %v470
      %v631 = vmul.f32 %v354, %v477
      %v632 = vmul.f32 %v354, %v484
      %v633 = vmul.f32 %v354, %v491
      %v634 = vmul.f32 %v354, %v498
      %v635 = vmul.f32 %v354, %v505
      %v636 = vmul.f32 %v354, %v512
      %v637 = vmul.f32 %v354, %v519
      %v638 = vmul.f32 %v354, %v526
      %v639 = vmul.f32 %v354, %v533
      %v640 = vmul.f32 %v354, %v540
      %v641 = vmul.f32 %v354, %v547
      %v642 = vmul.f32 %v354, %v554
      %v643 = vmul.f32 %v354, %v561
      %v644 = vmul.f32 %v354, %v568
      %v645 = vmul.f32 %v354, %v575
      %v646 = vmul.f32 %v354, %v582
      %679 = vset.pattern.permute.xlu0 0
      %680 = vperm.xlu0 %679, %v615
      %v681 = vpop.permute.xlu0 %680
      %682 = vset.pattern.permute.xlu0 0
      %683 = vperm.xlu0 %682, %v616
      %v684 = vpop.permute.xlu0 %683
      %685 = vset.pattern.permute.xlu0 0
      %686 = vperm.xlu0 %685, %v617
      %v687 = vpop.permute.xlu0 %686
      %688 = vset.pattern.permute.xlu0 0
      %689 = vperm.xlu0 %688, %v618
      %v690 = vpop.permute.xlu0 %689
      %691 = vset.pattern.permute.xlu0 0
      %692 = vperm.xlu0 %691, %v619
      %v693 = vpop.permute.xlu0 %692
      %694 = vset.pattern.permute.xlu0 0
      %695 = vperm.xlu0 %694, %v620
      %v696 = vpop.permute.xlu0 %695
      %697 = vset.pattern.permute.xlu0 0
      %698 = vperm.xlu0 %697, %v621
      %v699 = vpop.permute.xlu0 %698
      %700 = vset.pattern.permute.xlu0 0
      %701 = vperm.xlu0 %700, %v622
      %v702 = vpop.permute.xlu0 %701
      %703 = vset.pattern.permute.xlu0 0
      %704 = vperm.xlu0 %703, %v623
      %v705 = vpop.permute.xlu0 %704
      %706 = vset.pattern.permute.xlu0 0
      %707 = vperm.xlu0 %706, %v624
      %v708 = vpop.permute.xlu0 %707
      %709 = vset.pattern.permute.xlu0 0
      %710 = vperm.xlu0 %709, %v625
      %v711 = vpop.permute.xlu0 %710
      %712 = vset.pattern.permute.xlu0 0
      %713 = vperm.xlu0 %712, %v626
      %v714 = vpop.permute.xlu0 %713
      %715 = vset.pattern.permute.xlu0 0
      %716 = vperm.xlu0 %715, %v627
      %v717 = vpop.permute.xlu0 %716
      %718 = vset.pattern.permute.xlu0 0
      %719 = vperm.xlu0 %718, %v628
      %v720 = vpop.permute.xlu0 %719
      %721 = vset.pattern.permute.xlu0 0
      %722 = vperm.xlu0 %721, %v629
      %v723 = vpop.permute.xlu0 %722
      %724 = vset.pattern.permute.xlu0 0
      %725 = vperm.xlu0 %724, %v630
      %v726 = vpop.permute.xlu0 %725
      %727 = vset.pattern.permute.xlu0 0
      %728 = vperm.xlu0 %727, %v631
      %v729 = vpop.permute.xlu0 %728
      %730 = vset.pattern.permute.xlu0 0
      %731 = vperm.xlu0 %730, %v632
      %v732 = vpop.permute.xlu0 %731
      %733 = vset.pattern.permute.xlu0 0
      %734 = vperm.xlu0 %733, %v633
      %v735 = vpop.permute.xlu0 %734
      %736 = vset.pattern.permute.xlu0 0
      %737 = vperm.xlu0 %736, %v634
      %v738 = vpop.permute.xlu0 %737
      %739 = vset.pattern.permute.xlu0 0
      %740 = vperm.xlu0 %739, %v635
      %v741 = vpop.permute.xlu0 %740
      %742 = vset.pattern.permute.xlu0 0
      %743 = vperm.xlu0 %742, %v636
      %v744 = vpop.permute.xlu0 %743
      %745 = vset.pattern.permute.xlu0 0
      %746 = vperm.xlu0 %745, %v637
      %v747 = vpop.permute.xlu0 %746
      %748 = vset.pattern.permute.xlu0 0
      %749 = vperm.xlu0 %748, %v638
      %v750 = vpop.permute.xlu0 %749
      %751 = vset.pattern.permute.xlu0 0
      %752 = vperm.xlu0 %751, %v639
      %v753 = vpop.permute.xlu0 %752
      %754 = vset.pattern.permute.xlu0 0
      %755 = vperm.xlu0 %754, %v640
      %v756 = vpop.permute.xlu0 %755
      %757 = vset.pattern.permute.xlu0 0
      %758 = vperm.xlu0 %757, %v641
      %v759 = vpop.permute.xlu0 %758
      %760 = vset.pattern.permute.xlu0 0
      %761 = vperm.xlu0 %760, %v642
      %v762 = vpop.permute.xlu0 %761
      %763 = vset.pattern.permute.xlu0 0
      %764 = vperm.xlu0 %763, %v643
      %v765 = vpop.permute.xlu0 %764
      %766 = vset.pattern.permute.xlu0 0
      %767 = vperm.xlu0 %766, %v644
      %v768 = vpop.permute.xlu0 %767
      %769 = vset.pattern.permute.xlu0 0
      %770 = vperm.xlu0 %769, %v645
      %v771 = vpop.permute.xlu0 %770
      %772 = vset.pattern.permute.xlu0 0
      %773 = vperm.xlu0 %772, %v646
      %v774 = vpop.permute.xlu0 %773
      %v775 = vlaneseq
      %v776 = vshrl.u32 %v775, 7
      %v777 = vsub.s32 %v300, %v776
      %v778 = vrot.slane %v681, %v777
      %v779 = vlaneseq
      %v780 = vshrl.u32 %v779, 7
      %v781 = vsub.s32 %v300, %v780
      %v782 = vrot.slane %v684, %v781
      %v783 = vlaneseq
      %v784 = vshrl.u32 %v783, 7
      %v785 = vsub.s32 %v300, %v784
      %v786 = vrot.slane %v687, %v785
      %v787 = vlaneseq
      %v788 = vshrl.u32 %v787, 7
      %v789 = vsub.s32 %v300, %v788
      %v790 = vrot.slane %v690, %v789
      %v791 = vlaneseq
      %v792 = vshrl.u32 %v791, 7
      %v793 = vsub.s32 %v300, %v792
      %v794 = vrot.slane %v693, %v793
      %v795 = vlaneseq
      %v796 = vshrl.u32 %v795, 7
      %v797 = vsub.s32 %v300, %v796
      %v798 = vrot.slane %v696, %v797
      %v799 = vlaneseq
      %v800 = vshrl.u32 %v799, 7
      %v801 = vsub.s32 %v300, %v800
      %v802 = vrot.slane %v699, %v801
      %v803 = vlaneseq
      %v804 = vshrl.u32 %v803, 7
      %v805 = vsub.s32 %v300, %v804
      %v806 = vrot.slane %v702, %v805
      %v807 = vlaneseq
      %v808 = vshrl.u32 %v807, 7
      %v809 = vsub.s32 %v300, %v808
      %v810 = vrot.slane %v705, %v809
      %v811 = vlaneseq
      %v812 = vshrl.u32 %v811, 7
      %v813 = vsub.s32 %v300, %v812
      %v814 = vrot.slane %v708, %v813
      %v815 = vlaneseq
      %v816 = vshrl.u32 %v815, 7
      %v817 = vsub.s32 %v300, %v816
      %v818 = vrot.slane %v711, %v817
      %v819 = vlaneseq
      %v820 = vshrl.u32 %v819, 7
      %v821 = vsub.s32 %v300, %v820
      %v822 = vrot.slane %v714, %v821
      %v823 = vlaneseq
      %v824 = vshrl.u32 %v823, 7
      %v825 = vsub.s32 %v300, %v824
      %v826 = vrot.slane %v717, %v825
      %v827 = vlaneseq
      %v828 = vshrl.u32 %v827, 7
      %v829 = vsub.s32 %v300, %v828
      %v830 = vrot.slane %v720, %v829
      %v831 = vlaneseq
      %v832 = vshrl.u32 %v831, 7
      %v833 = vsub.s32 %v300, %v832
      %v834 = vrot.slane %v723, %v833
      %v835 = vlaneseq
      %v836 = vshrl.u32 %v835, 7
      %v837 = vsub.s32 %v300, %v836
      %v838 = vrot.slane %v726, %v837
      %v839 = vlaneseq
      %v840 = vshrl.u32 %v839, 7
      %v841 = vsub.s32 %v300, %v840
      %v842 = vrot.slane %v729, %v841
      %v843 = vlaneseq
      %v844 = vshrl.u32 %v843, 7
      %v845 = vsub.s32 %v300, %v844
      %v846 = vrot.slane %v732, %v845
      %v847 = vlaneseq
      %v848 = vshrl.u32 %v847, 7
      %v849 = vsub.s32 %v300, %v848
      %v850 = vrot.slane %v735, %v849
      %v851 = vlaneseq
      %v852 = vshrl.u32 %v851, 7
      %v853 = vsub.s32 %v300, %v852
      %v854 = vrot.slane %v738, %v853
      %v855 = vlaneseq
      %v856 = vshrl.u32 %v855, 7
      %v857 = vsub.s32 %v300, %v856
      %v858 = vrot.slane %v741, %v857
      %v859 = vlaneseq
      %v860 = vshrl.u32 %v859, 7
      %v861 = vsub.s32 %v300, %v860
      %v862 = vrot.slane %v744, %v861
      %v863 = vlaneseq
      %v864 = vshrl.u32 %v863, 7
      %v865 = vsub.s32 %v300, %v864
      %v866 = vrot.slane %v747, %v865
      %v867 = vlaneseq
      %v868 = vshrl.u32 %v867, 7
      %v869 = vsub.s32 %v300, %v868
      %v870 = vrot.slane %v750, %v869
      %v871 = vlaneseq
      %v872 = vshrl.u32 %v871, 7
      %v873 = vsub.s32 %v300, %v872
      %v874 = vrot.slane %v753, %v873
      %v875 = vlaneseq
      %v876 = vshrl.u32 %v875, 7
      %v877 = vsub.s32 %v300, %v876
      %v878 = vrot.slane %v756, %v877
      %v879 = vlaneseq
      %v880 = vshrl.u32 %v879, 7
      %v881 = vsub.s32 %v300, %v880
      %v882 = vrot.slane %v759, %v881
      %v883 = vlaneseq
      %v884 = vshrl.u32 %v883, 7
      %v885 = vsub.s32 %v300, %v884
      %v886 = vrot.slane %v762, %v885
      %v887 = vlaneseq
      %v888 = vshrl.u32 %v887, 7
      %v889 = vsub.s32 %v300, %v888
      %v890 = vrot.slane %v765, %v889
      %v891 = vlaneseq
      %v892 = vshrl.u32 %v891, 7
      %v893 = vsub.s32 %v300, %v892
      %v894 = vrot.slane %v768, %v893
      %v895 = vlaneseq
      %v896 = vshrl.u32 %v895, 7
      %v897 = vsub.s32 %v300, %v896
      %v898 = vrot.slane %v771, %v897
      %v899 = vlaneseq
      %v900 = vshrl.u32 %v899, 7
      %v901 = vsub.s32 %v300, %v900
      %v902 = vrot.slane %v774, %v901
      %v903 = vsel %vm345, %v782, %v778
      %vm904 = vcmask 1042434
      %v905 = vsel %vm904, %v786, %v903
      %vm906 = vcmask 1043459
      %v907 = vsel %vm906, %v790, %v905
      %vm908 = vcmask 1044484
      %v909 = vsel %vm908, %v794, %v907
      %vm910 = vcmask 1045509
      %v911 = vsel %vm910, %v798, %v909
      %vm912 = vcmask 1046534
      %v913 = vsel %vm912, %v802, %v911
      %vm914 = vcmask 1047559
      %v915 = vsel %vm914, %v806, %v913
      %v916 = vsel %vm345, %v814, %v810
      %v917 = vsel %vm904, %v818, %v916
      %v918 = vsel %vm906, %v822, %v917
      %v919 = vsel %vm908, %v826, %v918
      %v920 = vsel %vm910, %v830, %v919
      %v921 = vsel %vm912, %v834, %v920
      %v922 = vsel %vm914, %v838, %v921
      %v923 = vsel %vm345, %v846, %v842
      %v924 = vsel %vm904, %v850, %v923
      %v925 = vsel %vm906, %v854, %v924
      %v926 = vsel %vm908, %v858, %v925
      %v927 = vsel %vm910, %v862, %v926
      %v928 = vsel %vm912, %v866, %v927
      %v929 = vsel %vm914, %v870, %v928
      %v930 = vsel %vm345, %v878, %v874
      %v931 = vsel %vm904, %v882, %v930
      %v932 = vsel %vm906, %v886, %v931
      %v933 = vsel %vm908, %v890, %v932
      %v934 = vsel %vm910, %v894, %v933
      %v935 = vsel %vm912, %v898, %v934
      %v936 = vsel %vm914, %v902, %v935
      %vm941 = vcmask 15360
      %v942 = vsel %vm941, %v915, 0.0
      %943 = vadd.xlane.f32.xlu0 %v942
      %v944 = vpop.xlane.xlu0 %943
      %v945 = vsel %vm941, %v922, 0.0
      %946 = vadd.xlane.f32.xlu0 %v945
      %v947 = vpop.xlane.xlu0 %946
      %v948 = vsel %vm941, %v929, 0.0
      %949 = vadd.xlane.f32.xlu0 %v948
      %v950 = vpop.xlane.xlu0 %949
      %v951 = vsel %vm941, %v936, 0.0
      %952 = vadd.xlane.f32.xlu0 %v951
      %v953 = vpop.xlane.xlu0 %952
      %v954 = vmul.f32 %v197, %v219
      %v955 = vmul.f32 %v200, %v223
      %v956 = vmul.f32 %v203, %v227
      %v957 = vmul.f32 %v206, %v231
      %v958 = vmul.f32 %v197, %v238
      %v959 = vmul.f32 %v200, %v242
      %v960 = vmul.f32 %v203, %v246
      %v961 = vmul.f32 %v206, %v250
      %970 = vset.pattern.permute.xlu0 0
      %971 = vperm.xlu0 %970, %v954
      %v972 = vpop.permute.xlu0 %971
      %973 = vset.pattern.permute.xlu0 0
      %974 = vperm.xlu0 %973, %v955
      %v975 = vpop.permute.xlu0 %974
      %976 = vset.pattern.permute.xlu0 0
      %977 = vperm.xlu0 %976, %v956
      %v978 = vpop.permute.xlu0 %977
      %979 = vset.pattern.permute.xlu0 0
      %980 = vperm.xlu0 %979, %v957
      %v981 = vpop.permute.xlu0 %980
      %982 = vset.pattern.permute.xlu0 0
      %983 = vperm.xlu0 %982, %v958
      %v984 = vpop.permute.xlu0 %983
      %985 = vset.pattern.permute.xlu0 0
      %986 = vperm.xlu0 %985, %v959
      %v987 = vpop.permute.xlu0 %986
      %988 = vset.pattern.permute.xlu0 0
      %989 = vperm.xlu0 %988, %v960
      %v990 = vpop.permute.xlu0 %989
      %991 = vset.pattern.permute.xlu0 0
      %992 = vperm.xlu0 %991, %v961
      %v993 = vpop.permute.xlu0 %992
      %v994 = vlaneseq
      %v995 = vshrl.u32 %v994, 7
      %v996 = vsub.s32 %v300, %v995
      %v997 = vrot.slane %v972, %v996
      %v998 = vlaneseq
      %v999 = vshrl.u32 %v998, 7
      %v1000 = vsub.s32 %v305, %v999
      %v1001 = vrot.slane %v975, %v1000
      %v1002 = vsel %vm310, %v1001, %v997
      %v1003 = vlaneseq
      %v1004 = vshrl.u32 %v1003, 7
      %v1005 = vsub.s32 %v312, %v1004
      %v1006 = vrot.slane %v978, %v1005
      %v1007 = vsel %vm317, %v1006, %v1002
      %v1008 = vlaneseq
      %v1009 = vshrl.u32 %v1008, 7
      %v1010 = vsub.s32 %v319, %v1009
      %v1011 = vrot.slane %v981, %v1010
      %v1012 = vsel %vm324, %v1011, %v1007
      %v1013 = vlaneseq
      %v1014 = vshrl.u32 %v1013, 7
      %v1015 = vsub.s32 %v300, %v1014
      %v1016 = vrot.slane %v984, %v1015
      %v1017 = vlaneseq
      %v1018 = vshrl.u32 %v1017, 7
      %v1019 = vsub.s32 %v305, %v1018
      %v1020 = vrot.slane %v987, %v1019
      %v1021 = vsel %vm310, %v1020, %v1016
      %v1022 = vlaneseq
      %v1023 = vshrl.u32 %v1022, 7
      %v1024 = vsub.s32 %v312, %v1023
      %v1025 = vrot.slane %v990, %v1024
      %v1026 = vsel %vm317, %v1025, %v1021
      %v1027 = vlaneseq
      %v1028 = vshrl.u32 %v1027, 7
      %v1029 = vsub.s32 %v319, %v1028
      %v1030 = vrot.slane %v993, %v1029
      %v1031 = vsel %vm324, %v1030, %v1026
      %v1032 = vsel %vm345, %v1031, %v1012
      %v1034 = vsel %vm348, %v1032, 0.0
      %1035 = vadd.xlane.f32.xlu0 %v1034
      %v1036 = vpop.xlane.xlu0 %1035
      %vm1037 = vcmp.ge.f32.partialorder %v1036, 0.0
      %v1038 = vmul.f32 %v1036, 0.2
      %v1039 = vsel %vm1037, %v1036, %v1038
      %v1040 = vmul.f32 %v1039, %v365
      %v1041 = vmul.f32 %v1039, %v372
      %v1042 = vmul.f32 %v1039, %v379
      %v1043 = vmul.f32 %v1039, %v386
      %v1044 = vmul.f32 %v1039, %v393
      %v1045 = vmul.f32 %v1039, %v400
      %v1046 = vmul.f32 %v1039, %v407
      %v1047 = vmul.f32 %v1039, %v414
      %v1048 = vmul.f32 %v1039, %v421
      %v1049 = vmul.f32 %v1039, %v428
      %v1050 = vmul.f32 %v1039, %v435
      %v1051 = vmul.f32 %v1039, %v442
      %v1052 = vmul.f32 %v1039, %v449
      %v1053 = vmul.f32 %v1039, %v456
      %v1054 = vmul.f32 %v1039, %v463
      %v1055 = vmul.f32 %v1039, %v470
      %v1056 = vmul.f32 %v1039, %v477
      %v1057 = vmul.f32 %v1039, %v484
      %v1058 = vmul.f32 %v1039, %v491
      %v1059 = vmul.f32 %v1039, %v498
      %v1060 = vmul.f32 %v1039, %v505
      %v1061 = vmul.f32 %v1039, %v512
      %v1062 = vmul.f32 %v1039, %v519
      %v1063 = vmul.f32 %v1039, %v526
      %v1064 = vmul.f32 %v1039, %v533
      %v1065 = vmul.f32 %v1039, %v540
      %v1066 = vmul.f32 %v1039, %v547
      %v1067 = vmul.f32 %v1039, %v554
      %v1068 = vmul.f32 %v1039, %v561
      %v1069 = vmul.f32 %v1039, %v568
      %v1070 = vmul.f32 %v1039, %v575
      %v1071 = vmul.f32 %v1039, %v582
      %1104 = vset.pattern.permute.xlu0 0
      %1105 = vperm.xlu0 %1104, %v1040
      %v1106 = vpop.permute.xlu0 %1105
      %1107 = vset.pattern.permute.xlu0 0
      %1108 = vperm.xlu0 %1107, %v1041
      %v1109 = vpop.permute.xlu0 %1108
      %1110 = vset.pattern.permute.xlu0 0
      %1111 = vperm.xlu0 %1110, %v1042
      %v1112 = vpop.permute.xlu0 %1111
      %1113 = vset.pattern.permute.xlu0 0
      %1114 = vperm.xlu0 %1113, %v1043
      %v1115 = vpop.permute.xlu0 %1114
      %1116 = vset.pattern.permute.xlu0 0
      %1117 = vperm.xlu0 %1116, %v1044
      %v1118 = vpop.permute.xlu0 %1117
      %1119 = vset.pattern.permute.xlu0 0
      %1120 = vperm.xlu0 %1119, %v1045
      %v1121 = vpop.permute.xlu0 %1120
      %1122 = vset.pattern.permute.xlu0 0
      %1123 = vperm.xlu0 %1122, %v1046
      %v1124 = vpop.permute.xlu0 %1123
      %1125 = vset.pattern.permute.xlu0 0
      %1126 = vperm.xlu0 %1125, %v1047
      %v1127 = vpop.permute.xlu0 %1126
      %1128 = vset.pattern.permute.xlu0 0
      %1129 = vperm.xlu0 %1128, %v1048
      %v1130 = vpop.permute.xlu0 %1129
      %1131 = vset.pattern.permute.xlu0 0
      %1132 = vperm.xlu0 %1131, %v1049
      %v1133 = vpop.permute.xlu0 %1132
      %1134 = vset.pattern.permute.xlu0 0
      %1135 = vperm.xlu0 %1134, %v1050
      %v1136 = vpop.permute.xlu0 %1135
      %1137 = vset.pattern.permute.xlu0 0
      %1138 = vperm.xlu0 %1137, %v1051
      %v1139 = vpop.permute.xlu0 %1138
      %1140 = vset.pattern.permute.xlu0 0
      %1141 = vperm.xlu0 %1140, %v1052
      %v1142 = vpop.permute.xlu0 %1141
      %1143 = vset.pattern.permute.xlu0 0
      %1144 = vperm.xlu0 %1143, %v1053
      %v1145 = vpop.permute.xlu0 %1144
      %1146 = vset.pattern.permute.xlu0 0
      %1147 = vperm.xlu0 %1146, %v1054
      %v1148 = vpop.permute.xlu0 %1147
      %1149 = vset.pattern.permute.xlu0 0
      %1150 = vperm.xlu0 %1149, %v1055
      %v1151 = vpop.permute.xlu0 %1150
      %1152 = vset.pattern.permute.xlu0 0
      %1153 = vperm.xlu0 %1152, %v1056
      %v1154 = vpop.permute.xlu0 %1153
      %1155 = vset.pattern.permute.xlu0 0
      %1156 = vperm.xlu0 %1155, %v1057
      %v1157 = vpop.permute.xlu0 %1156
      %1158 = vset.pattern.permute.xlu0 0
      %1159 = vperm.xlu0 %1158, %v1058
      %v1160 = vpop.permute.xlu0 %1159
      %1161 = vset.pattern.permute.xlu0 0
      %1162 = vperm.xlu0 %1161, %v1059
      %v1163 = vpop.permute.xlu0 %1162
      %1164 = vset.pattern.permute.xlu0 0
      %1165 = vperm.xlu0 %1164, %v1060
      %v1166 = vpop.permute.xlu0 %1165
      %1167 = vset.pattern.permute.xlu0 0
      %1168 = vperm.xlu0 %1167, %v1061
      %v1169 = vpop.permute.xlu0 %1168
      %1170 = vset.pattern.permute.xlu0 0
      %1171 = vperm.xlu0 %1170, %v1062
      %v1172 = vpop.permute.xlu0 %1171
      %1173 = vset.pattern.permute.xlu0 0
      %1174 = vperm.xlu0 %1173, %v1063
      %v1175 = vpop.permute.xlu0 %1174
      %1176 = vset.pattern.permute.xlu0 0
      %1177 = vperm.xlu0 %1176, %v1064
      %v1178 = vpop.permute.xlu0 %1177
      %1179 = vset.pattern.permute.xlu0 0
      %1180 = vperm.xlu0 %1179, %v1065
      %v1181 = vpop.permute.xlu0 %1180
      %1182 = vset.pattern.permute.xlu0 0
      %1183 = vperm.xlu0 %1182, %v1066
      %v1184 = vpop.permute.xlu0 %1183
      %1185 = vset.pattern.permute.xlu0 0
      %1186 = vperm.xlu0 %1185, %v1067
      %v1187 = vpop.permute.xlu0 %1186
      %1188 = vset.pattern.permute.xlu0 0
      %1189 = vperm.xlu0 %1188, %v1068
      %v1190 = vpop.permute.xlu0 %1189
      %1191 = vset.pattern.permute.xlu0 0
      %1192 = vperm.xlu0 %1191, %v1069
      %v1193 = vpop.permute.xlu0 %1192
      %1194 = vset.pattern.permute.xlu0 0
      %1195 = vperm.xlu0 %1194, %v1070
      %v1196 = vpop.permute.xlu0 %1195
      %1197 = vset.pattern.permute.xlu0 0
      %1198 = vperm.xlu0 %1197, %v1071
      %v1199 = vpop.permute.xlu0 %1198
      %v1200 = vlaneseq
      %v1201 = vshrl.u32 %v1200, 7
      %v1202 = vsub.s32 %v300, %v1201
      %v1203 = vrot.slane %v1106, %v1202
      %v1204 = vlaneseq
      %v1205 = vshrl.u32 %v1204, 7
      %v1206 = vsub.s32 %v300, %v1205
      %v1207 = vrot.slane %v1109, %v1206
      %v1208 = vlaneseq
      %v1209 = vshrl.u32 %v1208, 7
      %v1210 = vsub.s32 %v300, %v1209
      %v1211 = vrot.slane %v1112, %v1210
      %v1212 = vlaneseq
      %v1213 = vshrl.u32 %v1212, 7
      %v1214 = vsub.s32 %v300, %v1213
      %v1215 = vrot.slane %v1115, %v1214
      %v1216 = vlaneseq
      %v1217 = vshrl.u32 %v1216, 7
      %v1218 = vsub.s32 %v300, %v1217
      %v1219 = vrot.slane %v1118, %v1218
      %v1220 = vlaneseq
      %v1221 = vshrl.u32 %v1220, 7
      %v1222 = vsub.s32 %v300, %v1221
      %v1223 = vrot.slane %v1121, %v1222
      %v1224 = vlaneseq
      %v1225 = vshrl.u32 %v1224, 7
      %v1226 = vsub.s32 %v300, %v1225
      %v1227 = vrot.slane %v1124, %v1226
      %v1228 = vlaneseq
      %v1229 = vshrl.u32 %v1228, 7
      %v1230 = vsub.s32 %v300, %v1229
      %v1231 = vrot.slane %v1127, %v1230
      %v1232 = vlaneseq
      %v1233 = vshrl.u32 %v1232, 7
      %v1234 = vsub.s32 %v300, %v1233
      %v1235 = vrot.slane %v1130, %v1234
      %v1236 = vlaneseq
      %v1237 = vshrl.u32 %v1236, 7
      %v1238 = vsub.s32 %v300, %v1237
      %v1239 = vrot.slane %v1133, %v1238
      %v1240 = vlaneseq
      %v1241 = vshrl.u32 %v1240, 7
      %v1242 = vsub.s32 %v300, %v1241
      %v1243 = vrot.slane %v1136, %v1242
      %v1244 = vlaneseq
      %v1245 = vshrl.u32 %v1244, 7
      %v1246 = vsub.s32 %v300, %v1245
      %v1247 = vrot.slane %v1139, %v1246
      %v1248 = vlaneseq
      %v1249 = vshrl.u32 %v1248, 7
      %v1250 = vsub.s32 %v300, %v1249
      %v1251 = vrot.slane %v1142, %v1250
      %v1252 = vlaneseq
      %v1253 = vshrl.u32 %v1252, 7
      %v1254 = vsub.s32 %v300, %v1253
      %v1255 = vrot.slane %v1145, %v1254
      %v1256 = vlaneseq
      %v1257 = vshrl.u32 %v1256, 7
      %v1258 = vsub.s32 %v300, %v1257
      %v1259 = vrot.slane %v1148, %v1258
      %v1260 = vlaneseq
      %v1261 = vshrl.u32 %v1260, 7
      %v1262 = vsub.s32 %v300, %v1261
      %v1263 = vrot.slane %v1151, %v1262
      %v1264 = vlaneseq
      %v1265 = vshrl.u32 %v1264, 7
      %v1266 = vsub.s32 %v300, %v1265
      %v1267 = vrot.slane %v1154, %v1266
      %v1268 = vlaneseq
      %v1269 = vshrl.u32 %v1268, 7
      %v1270 = vsub.s32 %v300, %v1269
      %v1271 = vrot.slane %v1157, %v1270
      %v1272 = vlaneseq
      %v1273 = vshrl.u32 %v1272, 7
      %v1274 = vsub.s32 %v300, %v1273
      %v1275 = vrot.slane %v1160, %v1274
      %v1276 = vlaneseq
      %v1277 = vshrl.u32 %v1276, 7
      %v1278 = vsub.s32 %v300, %v1277
      %v1279 = vrot.slane %v1163, %v1278
      %v1280 = vlaneseq
      %v1281 = vshrl.u32 %v1280, 7
      %v1282 = vsub.s32 %v300, %v1281
      %v1283 = vrot.slane %v1166, %v1282
      %v1284 = vlaneseq
      %v1285 = vshrl.u32 %v1284, 7
      %v1286 = vsub.s32 %v300, %v1285
      %v1287 = vrot.slane %v1169, %v1286
      %v1288 = vlaneseq
      %v1289 = vshrl.u32 %v1288, 7
      %v1290 = vsub.s32 %v300, %v1289
      %v1291 = vrot.slane %v1172, %v1290
      %v1292 = vlaneseq
      %v1293 = vshrl.u32 %v1292, 7
      %v1294 = vsub.s32 %v300, %v1293
      %v1295 = vrot.slane %v1175, %v1294
      %v1296 = vlaneseq
      %v1297 = vshrl.u32 %v1296, 7
      %v1298 = vsub.s32 %v300, %v1297
      %v1299 = vrot.slane %v1178, %v1298
      %v1300 = vlaneseq
      %v1301 = vshrl.u32 %v1300, 7
      %v1302 = vsub.s32 %v300, %v1301
      %v1303 = vrot.slane %v1181, %v1302
      %v1304 = vlaneseq
      %v1305 = vshrl.u32 %v1304, 7
      %v1306 = vsub.s32 %v300, %v1305
      %v1307 = vrot.slane %v1184, %v1306
      %v1308 = vlaneseq
      %v1309 = vshrl.u32 %v1308, 7
      %v1310 = vsub.s32 %v300, %v1309
      %v1311 = vrot.slane %v1187, %v1310
      %v1312 = vlaneseq
      %v1313 = vshrl.u32 %v1312, 7
      %v1314 = vsub.s32 %v300, %v1313
      %v1315 = vrot.slane %v1190, %v1314
      %v1316 = vlaneseq
      %v1317 = vshrl.u32 %v1316, 7
      %v1318 = vsub.s32 %v300, %v1317
      %v1319 = vrot.slane %v1193, %v1318
      %v1320 = vlaneseq
      %v1321 = vshrl.u32 %v1320, 7
      %v1322 = vsub.s32 %v300, %v1321
      %v1323 = vrot.slane %v1196, %v1322
      %v1324 = vlaneseq
      %v1325 = vshrl.u32 %v1324, 7
      %v1326 = vsub.s32 %v300, %v1325
      %v1327 = vrot.slane %v1199, %v1326
      %v1328 = vsel %vm345, %v1207, %v1203
      %v1329 = vsel %vm904, %v1211, %v1328
      %v1330 = vsel %vm906, %v1215, %v1329
      %v1331 = vsel %vm908, %v1219, %v1330
      %v1332 = vsel %vm910, %v1223, %v1331
      %v1333 = vsel %vm912, %v1227, %v1332
      %v1334 = vsel %vm914, %v1231, %v1333
      %v1335 = vsel %vm345, %v1239, %v1235
      %v1336 = vsel %vm904, %v1243, %v1335
      %v1337 = vsel %vm906, %v1247, %v1336
      %v1338 = vsel %vm908, %v1251, %v1337
      %v1339 = vsel %vm910, %v1255, %v1338
      %v1340 = vsel %vm912, %v1259, %v1339
      %v1341 = vsel %vm914, %v1263, %v1340
      %v1342 = vsel %vm345, %v1271, %v1267
      %v1343 = vsel %vm904, %v1275, %v1342
      %v1344 = vsel %vm906, %v1279, %v1343
      %v1345 = vsel %vm908, %v1283, %v1344
      %v1346 = vsel %vm910, %v1287, %v1345
      %v1347 = vsel %vm912, %v1291, %v1346
      %v1348 = vsel %vm914, %v1295, %v1347
      %v1349 = vsel %vm345, %v1303, %v1299
      %v1350 = vsel %vm904, %v1307, %v1349
      %v1351 = vsel %vm906, %v1311, %v1350
      %v1352 = vsel %vm908, %v1315, %v1351
      %v1353 = vsel %vm910, %v1319, %v1352
      %v1354 = vsel %vm912, %v1323, %v1353
      %v1355 = vsel %vm914, %v1327, %v1354
      %v1360 = vsel %vm941, %v1334, 0.0
      %1361 = vadd.xlane.f32.xlu0 %v1360
      %v1362 = vpop.xlane.xlu0 %1361
      %v1363 = vsel %vm941, %v1341, 0.0
      %1364 = vadd.xlane.f32.xlu0 %v1363
      %v1365 = vpop.xlane.xlu0 %1364
      %v1366 = vsel %vm941, %v1348, 0.0
      %1367 = vadd.xlane.f32.xlu0 %v1366
      %v1368 = vpop.xlane.xlu0 %1367
      %v1369 = vsel %vm941, %v1355, 0.0
      %1370 = vadd.xlane.f32.xlu0 %v1369
      %v1371 = vpop.xlane.xlu0 %1370
      %v1372 = vadd.f32 %v944, %v1362
      %v1373 = vadd.f32 %v947, %v1365
      %v1374 = vadd.f32 %v950, %v1368
      %v1375 = vadd.f32 %v953, %v1371
      %v1376 = vxor.u32 %v1372, 2147483648
      %v1377 = vxor.u32 %v1373, 2147483648
      %v1378 = vxor.u32 %v1374, 2147483648
      %v1379 = vxor.u32 %v1375, 2147483648
      %v1380 = vmul.f32 %v1376, 1.442695
      %v1381 = vpow.pop %v1380
      %v1382 = vmul.f32 %v1377, 1.442695
      %v1383 = vpow.pop %v1382
      %v1384 = vmul.f32 %v1378, 1.442695
      %v1385 = vpow.pop %v1384
      %v1386 = vmul.f32 %v1379, 1.442695
      %v1387 = vpow.pop %v1386
      %v1388 = vadd.f32 %v1381, 1.0
      %v1389 = vadd.f32 %v1383, 1.0
      %v1390 = vadd.f32 %v1385, 1.0
      %v1391 = vadd.f32 %v1387, 1.0
      %v1392 = vrcp.pop %v1388
      %v1393 = vmul.f32 1.0, %v1392
      %v1394 = vrcp.pop %v1389
      %v1395 = vmul.f32 1.0, %v1394
      %v1396 = vrcp.pop %v1390
      %v1397 = vmul.f32 1.0, %v1396
      %v1398 = vrcp.pop %v1391
      %v1399 = vmul.f32 1.0, %v1398
      %v1400 = vmul.f32 %v171, %v1393
      %v1401 = vmul.f32 %v172, %v1393
      %v1402 = vmul.f32 %v173, %v1395
      %v1403 = vmul.f32 %v174, %v1395
      %v1404 = vmul.f32 %v175, %v1397
      %v1405 = vmul.f32 %v176, %v1397
      %v1406 = vmul.f32 %v177, %v1399
      %v1407 = vmul.f32 %v178, %v1399
      %1408 = vst [vmem:[%s170] sm:$0xff] %v1400
      %1409 = vst [vmem:[%s170 + $0x8] sm:$0xff] %v1401
      %1410 = vst [vmem:[%s170 + $0x10] sm:$0xff] %v1402
      %1411 = vst [vmem:[%s170 + $0x18] sm:$0xff] %v1403
      %1412 = vst [vmem:[%s170 + $0x20] sm:$0xff] %v1404
      %1413 = vst [vmem:[%s170 + $0x28] sm:$0xff] %v1405
      %1414 = vst [vmem:[%s170 + $0x30] sm:$0xff] %v1406
      %1415 = vst [vmem:[%s170 + $0x38] sm:$0xff] %v1407
      %p1416 = scmp.lt.s32.totalorder %s14, 1
      %s1417 = scalar_select %p1416, %s14, 1
      %s1418 = smul.addr %s1417, 8
      %s1419 = smul.addr %s1418, 8
      %s1420 = scalar_lea.vmem %s3, %s1419
      // Predicated region
      $region33: #{_channel_attention_impl.1} parent=31 // pred_check
        %p1421 = pneg %p100
      $region34: #{_channel_attention_impl.1} parent=31 // pred_check_branch
        %1423 = sbr.rel (%p1421) target = $region36
      $region35: #{_channel_attention_impl.1} parent=31 // pred_region
        _
      $region36: #{_channel_attention_impl.1} parent=31 // pred_fallthru
        _
    $region32: #{_channel_attention_impl.1} parent=5 // pred_fallthru
      _
    %p1424 = scmp.le.s32.totalorder 2, %s9
    // Predicated region
    $region37: #{_channel_attention_impl.1} parent=5 // pred_check
      %p1425 = pneg %p1424
    $region38: #{_channel_attention_impl.1} parent=5 // pred_check_branch
      %1427 = sbr.rel (%p1425) target = $region40
    $region39: #{_channel_attention_impl.1} parent=5 // pred_region
      %s1428 = ssub.s32 %s9, 2
      // Predicated region
      $region41: #{_channel_attention_impl.1} parent=39 // pred_check
        %p1429 = pneg %p106
      $region42: #{_channel_attention_impl.1} parent=39 // pred_check_branch
        %1431 = sbr.rel (%p1429) target = $region44
      $region43: #{_channel_attention_impl.1} parent=39 // pred_region
        %p1432 = scmp.lt.s32.totalorder %s15, 1
        %s1433 = scalar_select %p1432, %s15, 1
        %s1434 = smul.addr %s1433, 8
        %s1435 = smul.addr %s1434, 8
        %s1436 = scalar_lea.vmem %s3, %s1435
      $region44: #{_channel_attention_impl.1} parent=39 // pred_fallthru
        _
    $region40: #{_channel_attention_impl.1} parent=5 // pred_fallthru
      _
  $region6: #{_channel_attention_impl.1} parent=0 // loop_footer
    %s13 = sadd.s32 1, %s9
  $region7: #{_channel_attention_impl.1} parent=0 // loop_footer_branch
    %8 = sbr.rel target = $region3
  $region8: #{_channel_attention_impl.1} parent=0 // loop_exit
    _

</llo_original>
